<compile_context>
chip_gen: v7x
topology: tpu7x:2x2x1
jax: 0.10.0
libtpu: 0.0.40
codegen_flags: <defaults>
</compile_context>

<pallas_src>
import math

import jax
import jax.numpy as jnp
from jax.experimental import pallas as pl
from jax.experimental.pallas import tpu as pltpu


# ---------------------------------------------------------------------------
# Kernel
# ---------------------------------------------------------------------------
def idefics2_mlp_kernel(x_ref, wg_ref, wu_ref, wd_ref, o_ref, acc_ref):
    """Grid = (m_tiles, k_tiles).  One (tm, H) x-tile, one (H, ti) gate tile,
    one (H, ti) up tile, one (ti, O) down tile.  Down projection is
    accumulated over k in an f32 VMEM scratch and written once at k==last."""
    k = pl.program_id(1)

    x = x_ref[...]                                                  # (tm, H)
    gate = jnp.dot(x, wg_ref[...], preferred_element_type=jnp.float32)
    up = jnp.dot(x, wu_ref[...], preferred_element_type=jnp.float32)

    # SiLU and the gating product in f32 (v5e has no bf16 VPU/EUP).
    h = (gate * jax.nn.sigmoid(gate)) * up                          # (tm, ti) f32

    # Down projection of this intermediate slice.
    partial = jnp.dot(h.astype(wd_ref.dtype), wd_ref[...],
                      preferred_element_type=jnp.float32)           # (tm, O) f32

    @pl.when(k == 0)
    def _():
        acc_ref[...] = partial          # direct write: no zero-fill + reload

    @pl.when(k > 0)
    def _():
        acc_ref[...] += partial

    @pl.when(k == pl.num_programs(1) - 1)
    def _():
        o_ref[...] = acc_ref[...].astype(o_ref.dtype)


# ---------------------------------------------------------------------------
# One-time weight preparation (cache this next to the params)
# ---------------------------------------------------------------------------
def _round_up(x, m):
    return ((x + m - 1) // m) * m


class PreparedWeights:
    """Padded / pre-cast Idefics2MLP weights.  Build once per parameter set
    (e.g. at model load) and reuse for every forward — this removes the
    per-call pad/cast HBM traffic."""

    def __init__(self, wg, wu, wd, ti, hidden_size, intermediate_size,
                 output_size, compute_dtype):
        self.wg = wg                    # (H, I_pad) compute_dtype
        self.wu = wu                    # (H, I_pad) compute_dtype
        self.wd = wd                    # (I_pad, O) compute_dtype
        self.ti = ti                    # reduction tile (multiple of 128)
        self.hidden_size = hidden_size
        self.intermediate_size = intermediate_size
        self.output_size = output_size
        self.compute_dtype = compute_dtype


def prepare_weights(wg, wu, wd, *, ti=512, compute_dtype=jnp.bfloat16):
    """wg/wu: (H, I), wd: (I, O) — (in, out) layout (nn.Linear weight.T)."""
    H, I = wg.shape
    O = wd.shape[1]
    assert wu.shape == (H, I) and wd.shape == (I, O)
    compute_dtype = jnp.dtype(compute_dtype)

    # Lane-aligned reduction tile (multiple of 128), clamped to padded I.
    ti = max(128, (int(ti) // 128) * 128)
    I_pad128 = _round_up(I, 128)
    ti_eff = min(ti, I_pad128)
    I_pad = _round_up(I, ti_eff)

    if I_pad != I:
        # Zero gate/up columns and zero down rows contribute exactly 0.
        wg = jnp.pad(wg, ((0, 0), (0, I_pad - I)))
        wu = jnp.pad(wu, ((0, 0), (0, I_pad - I)))
        wd = jnp.pad(wd, ((0, I_pad - I), (0, 0)))

    return PreparedWeights(
        wg=wg.astype(compute_dtype),
        wu=wu.astype(compute_dtype),
        wd=wd.astype(compute_dtype),
        ti=ti_eff,
        hidden_size=H,
        intermediate_size=I,
        output_size=O,
        compute_dtype=compute_dtype,
    )


# ---------------------------------------------------------------------------
# Tile plan (generation-aware)
# ---------------------------------------------------------------------------
def _vmem_capacity_bytes():
    try:
        return int(pltpu.get_tpu_info().vmem_capacity_bytes)
    except Exception:
        return 128 << 20        # v5e/v6e default; v7x has 64 MiB per TC


def _vmem_tile_bytes(tm, H, O, ti, cb, ob):
    # Double-buffered input/output streams + f32 accumulator scratch.
    return (2 * (tm * H * cb            # x tile
                 + 2 * H * ti * cb      # gate + up weight tiles
                 + ti * O * cb          # down weight tile
                 + tm * O * ob)         # output tile
            + tm * O * 4)               # f32 accumulator


def _pick_tm(M, H, O, ti, cb, ob, sub, budget):
    """Largest MXU-friendly token tile whose double-buffered plan fits VMEM."""
    for tm in (768, 640, 512, 384, 256, 128, 64, 32, 16, 8):
        if tm % sub:
            continue
        tm_eff = min(tm, _round_up(M, sub))
        if _vmem_tile_bytes(tm_eff, H, O, ti, cb, ob) <= budget:
            return tm_eff
    return sub


# ---------------------------------------------------------------------------
# Forward (fast path: pre-prepared weights)
# ---------------------------------------------------------------------------
def idefics2_mlp_prepared(x, weights: PreparedWeights, *, tm=None,
                          vmem_limit_bytes=None):
    """x: (..., H).  Returns (..., O) in x.dtype."""
    orig_shape = x.shape
    H = weights.hidden_size
    O = weights.output_size
    assert orig_shape[-1] == H

    I_pad = weights.wg.shape[1]
    ti = weights.ti
    nk = I_pad // ti
    compute_dtype = weights.compute_dtype
    out_dtype = x.dtype

    x2 = x.reshape(-1, H).astype(compute_dtype)
    M = x2.shape[0]

    cb = compute_dtype.itemsize
    ob = jnp.dtype(out_dtype).itemsize
    sub = max(8, 32 // cb)                      # sublane packing unit

    vmem_cap = _vmem_capacity_bytes()
    budget = int(0.70 * vmem_cap)               # leave compiler headroom

    if tm is None:
        tm_eff = _pick_tm(M, H, O, ti, cb, ob, sub, budget)
    else:
        tm = max(sub, (int(tm) // sub) * sub)
        tm_eff = min(tm, _round_up(M, sub))

    M_pad = _round_up(M, tm_eff)
    if M_pad != M:
        x2 = jnp.pad(x2, ((0, M_pad - M), (0, 0)))

    est = _vmem_tile_bytes(tm_eff, H, O, ti, cb, ob)
    if vmem_limit_bytes is None:
        # Headroom over the estimate, but never more than ~0.8 of physical
        # VMEM (v7x's 64 MiB must not be fully requested).
        vmem_limit_bytes = int(min(max(int(est * 1.3) + (8 << 20), 32 << 20),
                                   int(0.8 * vmem_cap)))

    grid = (M_pad // tm_eff, nk)

    out = pl.pallas_call(
        idefics2_mlp_kernel,
        out_shape=jax.ShapeDtypeStruct((M_pad, O), out_dtype),
        grid_spec=pltpu.PrefetchScalarGridSpec(
            num_scalar_prefetch=0,
            grid=grid,
            in_specs=[
                pl.BlockSpec((tm_eff, H), lambda i, k: (i, 0)),   # x
                pl.BlockSpec((H, ti), lambda i, k: (0, k)),       # gate W
                pl.BlockSpec((H, ti), lambda i, k: (0, k)),       # up W
                pl.BlockSpec((ti, O), lambda i, k: (k, 0)),       # down W
            ],
            out_specs=pl.BlockSpec((tm_eff, O), lambda i, k: (i, 0)),
            scratch_shapes=[pltpu.VMEM((tm_eff, O), jnp.float32)],
        ),
        compiler_params=pltpu.CompilerParams(
            dimension_semantics=("parallel", "arbitrary"),
            vmem_limit_bytes=vmem_limit_bytes,
        ),
    )(x2, weights.wg, weights.wu, weights.wd)

    if M_pad != M:
        out = out[:M]
    return out.reshape(*orig_shape[:-1], O)


def idefics2_mlp(x, wg, wu, wd, *, tm=None, ti=512,
                 compute_dtype=jnp.bfloat16):
    """Convenience path (re-prepares weights every call — fine for tests).
    For inference, call prepare_weights() once and use idefics2_mlp_prepared().
    """
    prepared = prepare_weights(wg, wu, wd, ti=ti, compute_dtype=compute_dtype)
    return idefics2_mlp_prepared(x, prepared, tm=tm)


# ---------------------------------------------------------------------------
# Helpers / reference
# ---------------------------------------------------------------------------
def init_linear_weight(key, in_features, out_features, dtype=jnp.float32):
    """nn.Linear default init: U(-1/sqrt(in), 1/sqrt(in)); returned as (in, out)."""
    bound = 1.0 / math.sqrt(in_features)
    w = jax.random.uniform(key, (out_features, in_features),
                           minval=-bound, maxval=bound, dtype=dtype)
    return w.T


def reference_mlp(x, wg, wu, wd):
    gate = x @ wg
    up = x @ wu
    return ((gate * jax.nn.sigmoid(gate)) * up) @ wd


# ---------------------------------------------------------------------------
# Self-test
# ---------------------------------------------------------------------------
if __name__ == "__main__":
    key = jax.random.PRNGKey(0)

    # --- test 1: small shapes matching the module's forward (f32 compute,
    #     exact-ish) ---
    batch, seq = 2, 8
    hidden_size, intermediate_size, output_size = 32, 64, 32
    kx, kg, ku, kd, k2 = jax.random.split(key, 5)

    x = jax.random.normal(kx, (batch, seq, hidden_size), dtype=jnp.float32)
    wg = init_linear_weight(kg, hidden_size, intermediate_size)
    wu = init_linear_weight(ku, hidden_size, intermediate_size)
    wd = init_linear_weight(kd, intermediate_size, output_size)

    out = jax.block_until_ready(
        idefics2_mlp(x, wg, wu, wd, compute_dtype=jnp.float32))
    ref = reference_mlp(x, wg, wu, wd)
    assert out.shape == (batch, seq, output_size)
    assert jnp.allclose(out, ref, atol=1e-4, rtol=1e-4), "f32 mismatch vs reference"

    # --- test 1b: default bf16 MXU path (f32 accumulation), prepared weights
    #     reused across two forwards (production usage pattern) ---
    prepared = prepare_weights(wg, wu, wd)          # one-time prep, bf16
    out_bf16 = jax.block_until_ready(idefics2_mlp_prepared(x, prepared))
    assert jnp.allclose(out_bf16, ref, atol=5e-2, rtol=5e-2), "bf16 mismatch"
    out_bf16_b = jax.block_until_ready(idefics2_mlp_prepared(x * 0.5, prepared))
    ref_b = reference_mlp(x * 0.5, wg, wu, wd)
    assert jnp.allclose(out_bf16_b, ref_b, atol=5e-2, rtol=5e-2), "bf16 reuse mismatch"

    # --- test 2: ragged M + multi-step intermediate reduction (exercises
    #     M padding, k-accumulation and the pl.when init/finalize path) ---
    b2, s2 = 3, 7                        # M = 21 (not a tile multiple)
    h2, i2, o2 = 128, 384, 256
    ka, kb, kc, ke = jax.random.split(k2, 4)
    x2 = jax.random.normal(ka, (b2, s2, h2), dtype=jnp.float32)
    wg2 = init_linear_weight(kb, h2, i2)
    wu2 = init_linear_weight(kc, h2, i2)
    wd2 = init_linear_weight(ke, i2, o2)

    prepared2 = prepare_weights(wg2, wu2, wd2, ti=128,
                                compute_dtype=jnp.float32)   # 3 reduction steps
    out2 = jax.block_until_ready(idefics2_mlp_prepared(x2, prepared2))
    ref2 = reference_mlp(x2, wg2, wu2, wd2)
    assert out2.shape == (b2, s2, o2)
    assert jnp.allclose(out2, ref2, atol=2e-4, rtol=2e-4), "tiled-reduction mismatch"

    print("KERNEL_OK")
</pallas_src>

<mosaic_0001>
module attributes {stable_mosaic.version = 11 : i64} {
  func.func @idefics2_mlp_kernel(%arg0: i32, %arg1: i32, %arg2: memref<16x32xf32, #tpu.memory_space<vmem>>, %arg3: memref<32x128xf32, #tpu.memory_space<vmem>>, %arg4: memref<32x128xf32, #tpu.memory_space<vmem>>, %arg5: memref<128x32xf32, #tpu.memory_space<vmem>>, %arg6: memref<16x32xf32, #tpu.memory_space<vmem>>, %arg7: memref<16x32xf32, #tpu.memory_space<vmem>>) attributes {dimension_semantics = [#tpu.dimension_semantics<parallel>, #tpu.dimension_semantics<arbitrary>], iteration_bounds = array<i64: 1, 1>, scalar_prefetch = 0 : i64, scratch_operands = 1 : i64, tpu.core_type = #tpu.core_type<tc>, window_params = [{transform_indices = @transform_0, window_bounds = array<i64: 16, 32>}, {transform_indices = @transform_1, window_bounds = array<i64: 32, 128>}, {transform_indices = @transform_2, window_bounds = array<i64: 32, 128>}, {transform_indices = @transform_3, window_bounds = array<i64: 128, 32>}, {transform_indices = @transform_4, window_bounds = array<i64: 16, 32>}]} {
    %c0 = arith.constant 0 : index
    %c0_0 = arith.constant 0 : index
    %0 = vector.load %arg2[%c0, %c0_0] : memref<16x32xf32, #tpu.memory_space<vmem>>, vector<16x32xf32>
    %c0_1 = arith.constant 0 : index
    %c0_2 = arith.constant 0 : index
    %1 = vector.load %arg3[%c0_1, %c0_2] : memref<32x128xf32, #tpu.memory_space<vmem>>, vector<32x128xf32>
    %cst = arith.constant dense<0.000000e+00> : vector<16x128xf32>
    %2 = tpu.matmul %0, %1, %cst {dimension_numbers = #tpu.dot_dimension_numbers<[1], [0], [0], [1], [0, 0, 1, 1], [], []>} : vector<16x32xf32>, vector<32x128xf32>, vector<16x128xf32> -> vector<16x128xf32>
    %c0_3 = arith.constant 0 : index
    %c0_4 = arith.constant 0 : index
    %3 = vector.load %arg4[%c0_3, %c0_4] : memref<32x128xf32, #tpu.memory_space<vmem>>, vector<32x128xf32>
    %cst_5 = arith.constant dense<0.000000e+00> : vector<16x128xf32>
    %4 = tpu.matmul %0, %3, %cst_5 {dimension_numbers = #tpu.dot_dimension_numbers<[1], [0], [0], [1], [0, 0, 1, 1], [], []>} : vector<16x32xf32>, vector<32x128xf32>, vector<16x128xf32> -> vector<16x128xf32>
    %5 = arith.negf %2 : vector<16x128xf32>
    %6 = math.exp %5 : vector<16x128xf32>
    %cst_6 = arith.constant 1.000000e+00 : f32
    %7 = vector.broadcast %cst_6 : f32 to vector<16x128xf32>
    %8 = arith.addf %7, %6 : vector<16x128xf32>
    %9 = arith.divf %7, %8 : vector<16x128xf32>
    %10 = arith.mulf %2, %9 : vector<16x128xf32>
    %11 = arith.mulf %10, %4 : vector<16x128xf32>
    %c0_7 = arith.constant 0 : index
    %c0_8 = arith.constant 0 : index
    %12 = vector.load %arg5[%c0_7, %c0_8] : memref<128x32xf32, #tpu.memory_space<vmem>>, vector<128x32xf32>
    %cst_9 = arith.constant dense<0.000000e+00> : vector<16x32xf32>
    %13 = tpu.matmul %11, %12, %cst_9 {dimension_numbers = #tpu.dot_dimension_numbers<[1], [0], [0], [1], [0, 0, 1, 1], [], []>} : vector<16x128xf32>, vector<128x32xf32>, vector<16x32xf32> -> vector<16x32xf32>
    %c0_i32 = arith.constant 0 : i32
    %14 = arith.cmpi eq, %arg1, %c0_i32 : i32
    %15 = arith.extui %14 : i1 to i32
    %c0_i32_10 = arith.constant 0 : i32
    %16 = arith.cmpi ne, %15, %c0_i32_10 : i32
    scf.if %16 {
      %c0_15 = arith.constant 0 : index
      %c0_16 = arith.constant 0 : index
      %23 = vector.load %arg7[%c0_15, %c0_16] : memref<16x32xf32, #tpu.memory_space<vmem>>, vector<16x32xf32>
      tpu.vector_store %arg7[%c0_15, %c0_16], %13 {strides = array<i32>} : memref<16x32xf32, #tpu.memory_space<vmem>>, vector<16x32xf32>,
    } else {
    }
    %c0_i32_11 = arith.constant 0 : i32
    %17 = arith.cmpi sgt, %arg1, %c0_i32_11 : i32
    %18 = arith.extui %17 : i1 to i32
    %c0_i32_12 = arith.constant 0 : i32
    %19 = arith.cmpi ne, %18, %c0_i32_12 : i32
    scf.if %19 {
      %c0_15 = arith.constant 0 : index
      %c0_16 = arith.constant 0 : index
      %23 = vector.load %arg7[%c0_15, %c0_16] : memref<16x32xf32, #tpu.memory_space<vmem>>, vector<16x32xf32>
      %24 = arith.addf %23, %13 : vector<16x32xf32>
      %c0_17 = arith.constant 0 : index
      %c0_18 = arith.constant 0 : index
      %25 = vector.load %arg7[%c0_17, %c0_18] : memref<16x32xf32, #tpu.memory_space<vmem>>, vector<16x32xf32>
      tpu.vector_store %arg7[%c0_17, %c0_18], %24 {strides = array<i32>} : memref<16x32xf32, #tpu.memory_space<vmem>>, vector<16x32xf32>,
    } else {
    }
    %c0_i32_13 = arith.constant 0 : i32
    %20 = arith.cmpi eq, %arg1, %c0_i32_13 : i32
    %21 = arith.extui %20 : i1 to i32
    %c0_i32_14 = arith.constant 0 : i32
    %22 = arith.cmpi ne, %21, %c0_i32_14 : i32
    scf.if %22 {
      %c0_15 = arith.constant 0 : index
      %c0_16 = arith.constant 0 : index
      %23 = vector.load %arg7[%c0_15, %c0_16] : memref<16x32xf32, #tpu.memory_space<vmem>>, vector<16x32xf32>
      %c0_17 = arith.constant 0 : index
      %c0_18 = arith.constant 0 : index
      %24 = vector.load %arg6[%c0_17, %c0_18] : memref<16x32xf32, #tpu.memory_space<vmem>>, vector<16x32xf32>
      tpu.vector_store %arg6[%c0_17, %c0_18], %23 {strides = array<i32>} : memref<16x32xf32, #tpu.memory_space<vmem>>, vector<16x32xf32>,
    } else {
    }
    return
  }
  func.func @transform_0(%arg0: i32, %arg1: i32) -> (i32, i32) {
    %c0_i32 = arith.constant 0 : i32
    %c0_i32_0 = arith.constant 0 : i32
    return %arg0, %c0_i32 : i32, i32
  }
  func.func @transform_1(%arg0: i32, %arg1: i32) -> (i32, i32) {
    %c0_i32 = arith.constant 0 : i32
    %c0_i32_0 = arith.constant 0 : i32
    return %c0_i32, %arg1 : i32, i32
  }
  func.func @transform_2(%arg0: i32, %arg1: i32) -> (i32, i32) {
    %c0_i32 = arith.constant 0 : i32
    %c0_i32_0 = arith.constant 0 : i32
    return %c0_i32, %arg1 : i32, i32
  }
  func.func @transform_3(%arg0: i32, %arg1: i32) -> (i32, i32) {
    %c0_i32 = arith.constant 0 : i32
    %c0_i32_0 = arith.constant 0 : i32
    return %arg1, %c0_i32 : i32, i32
  }
  func.func @transform_4(%arg0: i32, %arg1: i32) -> (i32, i32) {
    %c0_i32 = arith.constant 0 : i32
    %c0_i32_0 = arith.constant 0 : i32
    return %arg0, %c0_i32 : i32, i32
  }
}

</mosaic_0001>

<llo_original>
// kernel: tpu_custom_call.1
$region0: #{tpu_custom_call.1}
  #allocation0 [shape = 'u32[]', space=smem, size = 0x4, offset = 0x4, fixed_abs, tag = 'smem constant byte address 0x4 - core index']
  #allocation1 [shape = 'u32[144,128]{1,0:T(1,128)}', space=vmem, size = 0x12000, scoped, tag = 'internal scratch']
  #allocation2 [shape = 'f32[16,32]{1,0:T(8,128)}', space=vmem, size = 0x2000, scoped, tag = 'scratch operand']
  %s0 = inlined_call_operand.vmem [shape: f32[16,32], index: 0, kind: input, shape index: {}]
  %s1 = inlined_call_operand.vmem [shape: f32[32,128], index: 1, kind: input, shape index: {}]
  %s2 = inlined_call_operand.vmem [shape: f32[32,128], index: 2, kind: input, shape index: {}]
  %s3 = inlined_call_operand.vmem [shape: f32[128,32], index: 3, kind: input, shape index: {}]
  %s4 = inlined_call_operand.hbm [shape: f32[16,32], index: 4, kind: output, shape index: {}]
  %s5 = sld [smem:[#allocation0]]
  $region38: #{tpu_custom_call.1} parent=0
    _
  %s7 = ssub.s32 1, %s5
  %s8 = scalar_select 0, %s7, %s5
  $region1: #{tpu_custom_call.1} parent=0
    #allocation3 [shape = 'u8[8192]{0}', space=vmem, size = 0x2000, scoped, tag = 'output window, operand 0, single buffered']
    #allocation4 [shape = 's32[1]{0}', space=sflag, size = 0x4, scoped, tag = 'scoped memory for tpu_custom_call.1']
    %9 = vsyncpa [#allocation4], 0
    // Predicated region
    $region2: #{tpu_custom_call.1} parent=1 // pred_check
      _
    $region3: #{tpu_custom_call.1} parent=1 // pred_check_branch
      %11 = sbr.rel (0) target = $region5
    $region4: #{tpu_custom_call.1} parent=1 // pred_region
      _
    $region5: #{tpu_custom_call.1} parent=1 // pred_fallthru
      _
    // Predicated region
    $region6: #{tpu_custom_call.1} parent=1 // pred_check
      _
    $region7: #{tpu_custom_call.1} parent=1 // pred_check_branch
      %13 = sbr.rel (0) target = $region9
    $region8: #{tpu_custom_call.1} parent=1 // pred_region
      _
    $region9: #{tpu_custom_call.1} parent=1 // pred_fallthru
      _
    // Predicated region
    $region10: #{tpu_custom_call.1} parent=1 // pred_check
      _
    $region11: #{tpu_custom_call.1} parent=1 // pred_check_branch
      %15 = sbr.rel (0) target = $region13
    $region12: #{tpu_custom_call.1} parent=1 // pred_region
      _
    $region13: #{tpu_custom_call.1} parent=1 // pred_fallthru
      _
    // Predicated region
    $region14: #{tpu_custom_call.1} parent=1 // pred_check
      _
    $region15: #{tpu_custom_call.1} parent=1 // pred_check_branch
      %17 = sbr.rel (0) target = $region17
    $region16: #{tpu_custom_call.1} parent=1 // pred_region
      _
    $region17: #{tpu_custom_call.1} parent=1 // pred_fallthru
      _
    %v18 = vld [vmem:[%s0] sm:$0xff]
    %v19 = vld [vmem:[%s0 + $0x8] sm:$0xff]
    %v20 = vld [vmem:[%s1] sm:$0xff]
    %v21 = vld [vmem:[%s1 + $0x8] sm:$0xff]
    %v22 = vld [vmem:[%s1 + $0x10] sm:$0xff]
    %v23 = vld [vmem:[%s1 + $0x18] sm:$0xff]
    %vm24 = vcmask 261120
    %v26 = vsel %vm24, %v18, 0
    %v29 = vsel %vm24, %v19, 0
    %31 = vmatprep.subr.mxu0 0.0
    %32 = vmatpush1.msra.mxu0 %v20
    %33 = vmatprep.subr.mxu0 0.0
    %34 = vmatpush1.msra.mxu0 %v21
    %35 = vmatprep.subr.mxu0 0.0
    %36 = vmatpush1.msra.mxu0 %v22
    %37 = vmatprep.subr.mxu0 0.0
    %38 = vmatpush1.msra.mxu0 %v23
    %39 = vmatprep.subr.mxu0 0.0
    %40 = vmatpush1.msra.mxu0 0.0
    %41 = vmatprep.subr.mxu0 0.0
    %42 = vmatpush1.msra.mxu0 0.0
    %43 = vmatprep.subr.mxu0 0.0
    %44 = vmatpush1.msra.mxu0 0.0
    %45 = vmatprep.subr.mxu0 0.0
    %46 = vmatpush1.msra.mxu0 0.0
    %47 = vmatprep.subr.mxu0 0.0
    %48 = vmatpush1.msra.mxu0 0.0
    %49 = vmatprep.subr.mxu0 0.0
    %50 = vmatpush1.msra.mxu0 0.0
    %51 = vmatprep.subr.mxu0 0.0
    %52 = vmatpush1.msra.mxu0 0.0
    %53 = vmatprep.subr.mxu0 0.0
    %54 = vmatpush1.msra.mxu0 0.0
    %55 = vmatprep.subr.mxu0 0.0
    %56 = vmatpush1.msra.mxu0 0.0
    %57 = vmatprep.subr.mxu0 0.0
    %58 = vmatpush1.msra.mxu0 0.0
    %59 = vmatprep.subr.mxu0 0.0
    %60 = vmatpush1.msra.mxu0 0.0
    %61 = vmatprep.subr.mxu0 0.0
    %62 = vmatpush1.msra.mxu0 0.0
    %63 = vmatprep.subr.mxu0 0.0
    %64 = vmatpush1.msra.mxu0 0.0
    %65 = vmatprep.subr.mxu0 0.0
    %66 = vmatpush1.msra.mxu0 0.0
    %67 = vmatprep.subr.mxu0 0.0
    %68 = vmatpush1.msra.mxu0 0.0
    %69 = vmatprep.subr.mxu0 0.0
    %70 = vmatpush1.msra.mxu0 0.0
    %71 = vmatprep.subr.mxu0 0.0
    %72 = vmatpush1.msra.mxu0 0.0
    %73 = vmatprep.subr.mxu0 0.0
    %74 = vmatpush1.msra.mxu0 0.0
    %75 = vmatprep.subr.mxu0 0.0
    %76 = vmatpush1.msra.mxu0 0.0
    %77 = vmatprep.subr.mxu0 0.0
    %78 = vmatpush1.msra.mxu0 0.0
    %79 = vmatprep.subr.mxu0 0.0
    %80 = vmatpush1.msra.mxu0 0.0
    %81 = vmatprep.subr.mxu0 0.0
    %82 = vmatpush1.msra.mxu0 0.0
    %83 = vmatprep.subr.mxu0 0.0
    %84 = vmatpush1.msra.mxu0 0.0
    %85 = vmatprep.subr.mxu0 0.0
    %86 = vmatpush1.msra.mxu0 0.0
    %87 = vmatprep.subr.mxu0 0.0
    %88 = vmatpush1.msra.mxu0 0.0
    %89 = vmatprep.subr.mxu0 0.0
    %90 = vmatpush1.msra.mxu0 0.0
    %91 = vmatprep.subr.mxu0 0.0
    %92 = vmatpush1.msra.mxu0 0.0
    %93 = vmatprep.subr.mxu0 0.0
    %94 = vmatpush1.msra.mxu0 0.0
    %95 = vmatprep.mubr.f32.mxu0 0.0
    %96 = vmatmul.mubr.f32.gmra.mrb[0].mxu0 %v26
    %v97 = vpop.f32.mrb[0].mxu0
    %v98 = vadd.f32 0.0, %v97
    %v99 = vpop.f32.mrb[0].mxu0
    %100 = vmatprep.mubr.f32.mxu0 0.0
    %101 = vmatmul.mubr.f32.gmra.mrb[0].mxu0 %v29
    %v102 = vpop.f32.mrb[0].mxu0
    %v103 = vadd.f32 0.0, %v102
    %v104 = vpop.f32.mrb[0].mxu0
    %105 = vdwg.mxu0
    %v106 = vld [vmem:[%s2] sm:$0xff]
    %v107 = vld [vmem:[%s2 + $0x8] sm:$0xff]
    %v108 = vld [vmem:[%s2 + $0x10] sm:$0xff]
    %v109 = vld [vmem:[%s2 + $0x18] sm:$0xff]
    %110 = vmatprep.subr.mxu0 0.0
    %111 = vmatpush1.msra.mxu0 %v106
    %112 = vmatprep.subr.mxu0 0.0
    %113 = vmatpush1.msra.mxu0 %v107
    %114 = vmatprep.subr.mxu0 0.0
    %115 = vmatpush1.msra.mxu0 %v108
    %116 = vmatprep.subr.mxu0 0.0
    %117 = vmatpush1.msra.mxu0 %v109
    %118 = vmatprep.subr.mxu0 0.0
    %119 = vmatpush1.msra.mxu0 0.0
    %120 = vmatprep.subr.mxu0 0.0
    %121 = vmatpush1.msra.mxu0 0.0
    %122 = vmatprep.subr.mxu0 0.0
    %123 = vmatpush1.msra.mxu0 0.0
    %124 = vmatprep.subr.mxu0 0.0
    %125 = vmatpush1.msra.mxu0 0.0
    %126 = vmatprep.subr.mxu0 0.0
    %127 = vmatpush1.msra.mxu0 0.0
    %128 = vmatprep.subr.mxu0 0.0
    %129 = vmatpush1.msra.mxu0 0.0
    %130 = vmatprep.subr.mxu0 0.0
    %131 = vmatpush1.msra.mxu0 0.0
    %132 = vmatprep.subr.mxu0 0.0
    %133 = vmatpush1.msra.mxu0 0.0
    %134 = vmatprep.subr.mxu0 0.0
    %135 = vmatpush1.msra.mxu0 0.0
    %136 = vmatprep.subr.mxu0 0.0
    %137 = vmatpush1.msra.mxu0 0.0
    %138 = vmatprep.subr.mxu0 0.0
    %139 = vmatpush1.msra.mxu0 0.0
    %140 = vmatprep.subr.mxu0 0.0
    %141 = vmatpush1.msra.mxu0 0.0
    %142 = vmatprep.subr.mxu0 0.0
    %143 = vmatpush1.msra.mxu0 0.0
    %144 = vmatprep.subr.mxu0 0.0
    %145 = vmatpush1.msra.mxu0 0.0
    %146 = vmatprep.subr.mxu0 0.0
    %147 = vmatpush1.msra.mxu0 0.0
    %148 = vmatprep.subr.mxu0 0.0
    %149 = vmatpush1.msra.mxu0 0.0
    %150 = vmatprep.subr.mxu0 0.0
    %151 = vmatpush1.msra.mxu0 0.0
    %152 = vmatprep.subr.mxu0 0.0
    %153 = vmatpush1.msra.mxu0 0.0
    %154 = vmatprep.subr.mxu0 0.0
    %155 = vmatpush1.msra.mxu0 0.0
    %156 = vmatprep.subr.mxu0 0.0
    %157 = vmatpush1.msra.mxu0 0.0
    %158 = vmatprep.subr.mxu0 0.0
    %159 = vmatpush1.msra.mxu0 0.0
    %160 = vmatprep.subr.mxu0 0.0
    %161 = vmatpush1.msra.mxu0 0.0
    %162 = vmatprep.subr.mxu0 0.0
    %163 = vmatpush1.msra.mxu0 0.0
    %164 = vmatprep.subr.mxu0 0.0
    %165 = vmatpush1.msra.mxu0 0.0
    %166 = vmatprep.subr.mxu0 0.0
    %167 = vmatpush1.msra.mxu0 0.0
    %168 = vmatprep.subr.mxu0 0.0
    %169 = vmatpush1.msra.mxu0 0.0
    %170 = vmatprep.subr.mxu0 0.0
    %171 = vmatpush1.msra.mxu0 0.0
    %172 = vmatprep.subr.mxu0 0.0
    %173 = vmatpush1.msra.mxu0 0.0
    %174 = vmatprep.mubr.f32.mxu0 0.0
    %175 = vmatmul.mubr.f32.gmra.mrb[0].mxu0 %v26
    %v176 = vpop.f32.mrb[0].mxu0
    %v177 = vadd.f32 0.0, %v176
    %v178 = vpop.f32.mrb[0].mxu0
    %179 = vmatprep.mubr.f32.mxu0 0.0
    %180 = vmatmul.mubr.f32.gmra.mrb[0].mxu0 %v29
    %v181 = vpop.f32.mrb[0].mxu0
    %v182 = vadd.f32 0.0, %v181
    %v183 = vpop.f32.mrb[0].mxu0
    %184 = vdwg.mxu0
    %v185 = vxor.u32 %v98, 2147483648
    %v186 = vxor.u32 %v103, 2147483648
    %v187 = vmul.f32 %v185, 1.442695
    %v188 = vpow.pop %v187
    %v189 = vmul.f32 %v186, 1.442695
    %v190 = vpow.pop %v189
    %v191 = vadd.f32 %v188, 1.0
    %v192 = vadd.f32 %v190, 1.0
    %v193 = vrcp.pop %v191
    %v194 = vmul.f32 1.0, %v193
    %v195 = vrcp.pop %v192
    %v196 = vmul.f32 1.0, %v195
    %v197 = vmul.f32 %v98, %v194
    %v198 = vmul.f32 %v103, %v196
    %v199 = vmul.f32 %v197, %v177
    %v200 = vmul.f32 %v198, %v182
    %v201 = vld [vmem:[%s3] sm:$0xff]
    %v202 = vld [vmem:[%s3 + $0x8] sm:$0xff]
    %v203 = vld [vmem:[%s3 + $0x10] sm:$0xff]
    %v204 = vld [vmem:[%s3 + $0x18] sm:$0xff]
    %v205 = vld [vmem:[%s3 + $0x20] sm:$0xff]
    %v206 = vld [vmem:[%s3 + $0x28] sm:$0xff]
    %v207 = vld [vmem:[%s3 + $0x30] sm:$0xff]
    %v208 = vld [vmem:[%s3 + $0x38] sm:$0xff]
    %v209 = vld [vmem:[%s3 + $0x40] sm:$0xff]
    %v210 = vld [vmem:[%s3 + $0x48] sm:$0xff]
    %v211 = vld [vmem:[%s3 + $0x50] sm:$0xff]
    %v212 = vld [vmem:[%s3 + $0x58] sm:$0xff]
    %v213 = vld [vmem:[%s3 + $0x60] sm:$0xff]
    %v214 = vld [vmem:[%s3 + $0x68] sm:$0xff]
    %v215 = vld [vmem:[%s3 + $0x70] sm:$0xff]
    %v216 = vld [vmem:[%s3 + $0x78] sm:$0xff]
    %217 = vmatprep.subr.mxu0 0.0
    %218 = vmatpush1.msra.mxu0 %v201
    %219 = vmatprep.subr.mxu0 0.0
    %220 = vmatpush1.msra.mxu0 %v202
    %221 = vmatprep.subr.mxu0 0.0
    %222 = vmatpush1.msra.mxu0 %v203
    %223 = vmatprep.subr.mxu0 0.0
    %224 = vmatpush1.msra.mxu0 %v204
    %225 = vmatprep.subr.mxu0 0.0
    %226 = vmatpush1.msra.mxu0 %v205
    %227 = vmatprep.subr.mxu0 0.0
    %228 = vmatpush1.msra.mxu0 %v206
    %229 = vmatprep.subr.mxu0 0.0
    %230 = vmatpush1.msra.mxu0 %v207
    %231 = vmatprep.subr.mxu0 0.0
    %232 = vmatpush1.msra.mxu0 %v208
    %233 = vmatprep.subr.mxu0 0.0
    %234 = vmatpush1.msra.mxu0 %v209
    %235 = vmatprep.subr.mxu0 0.0
    %236 = vmatpush1.msra.mxu0 %v210
    %237 = vmatprep.subr.mxu0 0.0
    %238 = vmatpush1.msra.mxu0 %v211
    %239 = vmatprep.subr.mxu0 0.0
    %240 = vmatpush1.msra.mxu0 %v212
    %241 = vmatprep.subr.mxu0 0.0
    %242 = vmatpush1.msra.mxu0 %v213
    %243 = vmatprep.subr.mxu0 0.0
    %244 = vmatpush1.msra.mxu0 %v214
    %245 = vmatprep.subr.mxu0 0.0
    %246 = vmatpush1.msra.mxu0 %v215
    %247 = vmatprep.subr.mxu0 0.0
    %248 = vmatpush1.msra.mxu0 %v216
    %249 = vmatprep.subr.mxu0 0.0
    %250 = vmatpush1.msra.mxu0 0.0
    %251 = vmatprep.subr.mxu0 0.0
    %252 = vmatpush1.msra.mxu0 0.0
    %253 = vmatprep.subr.mxu0 0.0
    %254 = vmatpush1.msra.mxu0 0.0
    %255 = vmatprep.subr.mxu0 0.0
    %256 = vmatpush1.msra.mxu0 0.0
    %257 = vmatprep.subr.mxu0 0.0
    %258 = vmatpush1.msra.mxu0 0.0
    %259 = vmatprep.subr.mxu0 0.0
    %260 = vmatpush1.msra.mxu0 0.0
    %261 = vmatprep.subr.mxu0 0.0
    %262 = vmatpush1.msra.mxu0 0.0
    %263 = vmatprep.subr.mxu0 0.0
    %264 = vmatpush1.msra.mxu0 0.0
    %265 = vmatprep.subr.mxu0 0.0
    %266 = vmatpush1.msra.mxu0 0.0
    %267 = vmatprep.subr.mxu0 0.0
    %268 = vmatpush1.msra.mxu0 0.0
    %269 = vmatprep.subr.mxu0 0.0
    %270 = vmatpush1.msra.mxu0 0.0
    %271 = vmatprep.subr.mxu0 0.0
    %272 = vmatpush1.msra.mxu0 0.0
    %273 = vmatprep.subr.mxu0 0.0
    %274 = vmatpush1.msra.mxu0 0.0
    %275 = vmatprep.subr.mxu0 0.0
    %276 = vmatpush1.msra.mxu0 0.0
    %277 = vmatprep.subr.mxu0 0.0
    %278 = vmatpush1.msra.mxu0 0.0
    %279 = vmatprep.subr.mxu0 0.0
    %280 = vmatpush1.msra.mxu0 0.0
    %281 = vmatprep.mubr.f32.mxu0 0.0
    %282 = vmatmul.mubr.f32.gmra.mrb[0].mxu0 %v199
    %v283 = vpop.f32.mrb[0].mxu0
    %v284 = vadd.f32 0.0, %v283
    %v285 = vpop.f32.mrb[0].mxu0
    %286 = vmatprep.mubr.f32.mxu0 0.0
    %287 = vmatmul.mubr.f32.gmra.mrb[0].mxu0 %v200
    %v288 = vpop.f32.mrb[0].mxu0
    %v289 = vadd.f32 0.0, %v288
    %v290 = vpop.f32.mrb[0].mxu0
    %291 = vdwg.mxu0
    %p292 = scmp.eq.s32.totalorder 0, 0
    // Predicated region
    $region18: #{tpu_custom_call.1} parent=1 // pred_check
      %p293 = pneg %p292
    $region19: #{tpu_custom_call.1} parent=1 // pred_check_branch
      %295 = sbr.rel (%p293) target = $region21
    $region20: #{tpu_custom_call.1} parent=1 // pred_region
      %296 = vst.msk [vmem:[#allocation2] sm:$0xff] %vm24, %v284
      %297 = vst.msk [vmem:[#allocation2 + $0x8] sm:$0xff] %vm24, %v289
    $region21: #{tpu_custom_call.1} parent=1 // pred_fallthru
      _
    %p298 = scmp.gt.s32.totalorder 0, 0
    // Predicated region
    $region22: #{tpu_custom_call.1} parent=1 // pred_check
      %p299 = pneg %p298
    $region23: #{tpu_custom_call.1} parent=1 // pred_check_branch
      %301 = sbr.rel (%p299) target = $region25
    $region24: #{tpu_custom_call.1} parent=1 // pred_region
      %v302 = vld [vmem:[#allocation2] sm:$0xff]
      %v303 = vld [vmem:[#allocation2 + $0x8] sm:$0xff]
      %v304 = vadd.f32 %v302, %v284
      %v305 = vadd.f32 %v303, %v289
      %306 = vst.msk [vmem:[#allocation2] sm:$0xff] %vm24, %v304
      %307 = vst.msk [vmem:[#allocation2 + $0x8] sm:$0xff] %vm24, %v305
    $region25: #{tpu_custom_call.1} parent=1 // pred_fallthru
      _
    // Predicated region
    $region26: #{tpu_custom_call.1} parent=1 // pred_check
      %p308 = pneg %p292
    $region27: #{tpu_custom_call.1} parent=1 // pred_check_branch
      %310 = sbr.rel (%p308) target = $region29
    $region28: #{tpu_custom_call.1} parent=1 // pred_region
      %v311 = vld [vmem:[#allocation2] sm:$0xff]
      %v312 = vld [vmem:[#allocation2 + $0x8] sm:$0xff]
      %313 = vst.msk [vmem:[#allocation3] sm:$0xff] %vm24, %v311
      %314 = vst.msk [vmem:[#allocation3 + $0x8] sm:$0xff] %vm24, %v312
    $region29: #{tpu_custom_call.1} parent=1 // pred_fallthru
      _
    // Predicated region
    $region30: #{tpu_custom_call.1} parent=1 // pred_check
      _
    $region31: #{tpu_custom_call.1} parent=1 // pred_check_branch
      %316 = sbr.rel (0) target = $region33
    $region32: #{tpu_custom_call.1} parent=1 // pred_region
      %s318 = ssub.s32 256, 256
      %319 = vsyncadd [#allocation4], %s318
      %s320 = sshll.u32 [#allocation3], 4
      %s321 = int_to_ptr.vmem [resolvable:$true] %s320
      %326 = dma.vmem_to_hbm [thread:$0]  %s321, 256, %s4, [#allocation4], 128, 128, 8
    $region33: #{tpu_custom_call.1} parent=1 // pred_fallthru
      _
    // Predicated region
    $region34: #{tpu_custom_call.1} parent=1 // pred_check
      _
    $region35: #{tpu_custom_call.1} parent=1 // pred_check_branch
      %328 = sbr.rel (0) target = $region37
    $region36: #{tpu_custom_call.1} parent=1 // pred_region
      %329 = dma.done [#allocation4], 256
    $region37: #{tpu_custom_call.1} parent=1 // pred_fallthru
      _
    %330 = vsyncpa [#allocation4], 1

</llo_original>
